<compile_context>
chip_gen: v7x
topology: tpu7x:2x2x1
jax: 0.10.0
libtpu: 0.0.40
codegen_flags: <defaults>
</compile_context>

<pallas_src>
import jax
import jax.numpy as jnp
from jax.experimental import pallas as pl
from jax.experimental.pallas import tpu as pltpu

BITS_WEIGHT = 4  # kwargs['bits_weight']


def _round_up(x, m):
    return (x + m - 1) // m * m


# ----------------------------------------------------------------------------
# Kernel 1: weight quantization + bias correction (one shot, unpadded weight)
# ----------------------------------------------------------------------------
def _quantize_weight_kernel(w_ref, wq_ref):
    """w_ref, wq_ref: (Cout, K) f32 — same layout as weight.reshape(Cout, -1)."""
    w = w_ref[...].astype(jnp.float32)

    # MaxAbsStaticQuantization (symmetric=True, uint=True)
    alpha = jnp.max(jnp.abs(w))
    qmax = float(2 ** BITS_WEIGHT - 1)
    delta = jnp.maximum(2.0 * alpha / qmax, 1e-8)
    t = jnp.clip(jnp.round((w + alpha) / delta), 0.0, qmax)
    wq = t * delta - alpha

    # bias_corr (bcorr_w=True): per output-channel mean correction
    bcorr = jnp.mean(wq, axis=1, keepdims=True) - jnp.mean(w, axis=1, keepdims=True)
    wq_ref[...] = (wq - bcorr).astype(wq_ref.dtype)


# ----------------------------------------------------------------------------
# Kernel 2: tiled (M-tile) matmul + bias — patches(bf16) @ Wq(bf16) -> f32
# ----------------------------------------------------------------------------
def _matmul_bias_kernel(p_ref, w_ref, b_ref, o_ref):
    """p_ref: (TM, K_pad) bf16, w_ref: (K_pad, Cout_pad) bf16 (pre-transposed, no
    in-kernel transpose), b_ref: (1, Cout_pad) f32, o_ref: (TM, Cout_pad) f32."""
    acc = jnp.dot(p_ref[...], w_ref[...], preferred_element_type=jnp.float32)
    o_ref[...] = (acc + b_ref[...]).astype(o_ref.dtype)


# ----------------------------------------------------------------------------
# Wrapper glue
# ----------------------------------------------------------------------------
def _im2col_nchw(x, kh, kw):
    """x: (N, Cin, H, W) -> patches (N*H*W, Cin*kh*kw), 'same' padding, stride 1.
    Flattened K index is ci*kh*kw + dh*kw + dw, matching weight.reshape(Cout, -1)."""
    n, cin, h, w = x.shape
    ph, pw = (kh - 1) // 2, (kw - 1) // 2
    xp = jnp.pad(x, ((0, 0), (0, 0), (ph, ph), (pw, pw)))
    slabs = []
    for dh in range(kh):
        for dw in range(kw):
            slabs.append(xp[:, :, dh:dh + h, dw:dw + w])     # (N, Cin, H, W)
    patches = jnp.stack(slabs, axis=2)                       # (N, Cin, kh*kw, H, W)
    patches = patches.reshape(n, cin * kh * kw, h, w)        # (N, K, H, W)
    patches = patches.transpose(0, 2, 3, 1)                  # (N, H, W, K)
    return patches.reshape(n * h * w, cin * kh * kw)


def parameter_module_wrapper_post_forward(x, weight, bias, *, tm=512):
    """x: (N, Cin, H, W), weight: (Cout, Cin, KH, KW), bias: (Cout,) -> (N, Cout, H, W).

    tm: rows of the im2col matrix processed per grid step. 512-1024 is the
    production sweet spot (sized so 2x bf16 patch buffers + 2x f32 output
    buffers + resident weight stay well inside v7x's 64 MiB VMEM)."""
    n, cin, h, w = x.shape
    cout, _, kh, kw = weight.shape
    k = cin * kh * kw

    # --- Kernel 1: quantize + bias-correct the (unpadded) weight ---
    w_ck = weight.reshape(cout, k).astype(jnp.float32)        # (Cout, K)
    wq_ck = pl.pallas_call(
        _quantize_weight_kernel,
        out_shape=jax.ShapeDtypeStruct((cout, k), jnp.float32),
        in_specs=[pl.BlockSpec((cout, k), lambda: (0, 0))],
        out_specs=pl.BlockSpec((cout, k), lambda: (0, 0)),
    )(w_ck)

    # --- glue: im2col, lane-dense padding (K, Cout -> multiples of 128), bf16 ---
    patches = _im2col_nchw(x, kh, kw)                         # (M, K) f32
    m = patches.shape[0]
    k_pad = _round_up(k, 128)
    cout_pad = _round_up(cout, 128)
    tm = min(tm, _round_up(m, 8))
    m_pad = _round_up(m, tm)

    patches_p = jnp.pad(patches.astype(jnp.bfloat16),
                        ((0, m_pad - m), (0, k_pad - k)))     # (M_pad, K_pad) bf16
    wq_kc = jnp.pad(wq_ck.T.astype(jnp.bfloat16),
                    ((0, k_pad - k), (0, cout_pad - cout)))   # (K_pad, Cout_pad) bf16
    bias_p = jnp.pad(bias.astype(jnp.float32).reshape(1, cout),
                     ((0, 0), (0, cout_pad - cout)))          # (1, Cout_pad) f32

    grid = (m_pad // tm,)

    # VMEM budget: double-buffered bf16 patch tiles + f32 output tiles + weight/bias.
    vmem_bytes = (2 * tm * k_pad * 2
                  + 2 * tm * cout_pad * 4
                  + 2 * k_pad * cout_pad * 2
                  + 2 * cout_pad * 4)
    vmem_limit = int(min(max(2 * vmem_bytes, 4 << 20), 32 << 20))

    cost = pl.CostEstimate(
        flops=2 * m_pad * k_pad * cout_pad,
        transcendentals=0,
        bytes_accessed=(m_pad * k_pad * 2 + k_pad * cout_pad * 2
                        + cout_pad * 4 + m_pad * cout_pad * 4),
    )

    out_flat = pl.pallas_call(
        _matmul_bias_kernel,
        out_shape=jax.ShapeDtypeStruct((m_pad, cout_pad), jnp.float32),
        grid_spec=pltpu.PrefetchScalarGridSpec(
            num_scalar_prefetch=0,
            grid=grid,
            in_specs=[
                pl.BlockSpec((tm, k_pad), lambda i: (i, 0)),
                pl.BlockSpec((k_pad, cout_pad), lambda i: (0, 0)),
                pl.BlockSpec((1, cout_pad), lambda i: (0, 0)),
            ],
            out_specs=pl.BlockSpec((tm, cout_pad), lambda i: (i, 0)),
        ),
        compiler_params=pltpu.CompilerParams(
            dimension_semantics=("parallel",),   # M tiles are independent -> megacore on v7x
            vmem_limit_bytes=vmem_limit,
        ),
        cost_estimate=cost,
    )(patches_p, wq_kc, bias_p)

    out = out_flat[:m, :cout].reshape(n, h, w, cout).transpose(0, 3, 1, 2)  # NCHW
    return out


# ----------------------------------------------------------------------------
# Pure-JAX reference of the wrapper forward (quantize + bias-corr + conv)
# ----------------------------------------------------------------------------
def _reference_forward(x, weight, bias, matmul_dtype=jnp.float32):
    w = weight.astype(jnp.float32)
    alpha = jnp.max(jnp.abs(w))
    qmax = float(2 ** BITS_WEIGHT - 1)
    delta = jnp.maximum(2.0 * alpha / qmax, 1e-8)
    wq = jnp.clip(jnp.round((w + alpha) / delta), 0.0, qmax) * delta - alpha
    cout = w.shape[0]
    bcorr = wq.reshape(cout, -1).mean(-1) - w.reshape(cout, -1).mean(-1)
    wq = wq - bcorr.reshape(cout, 1, 1, 1)
    out = jax.lax.conv_general_dilated(
        x.astype(matmul_dtype), wq.astype(matmul_dtype),
        window_strides=(1, 1), padding="SAME",
        dimension_numbers=("NCHW", "OIHW", "NCHW"),
        preferred_element_type=jnp.float32)
    return out + bias.astype(jnp.float32).reshape(1, cout, 1, 1)


if __name__ == "__main__":
    key = jax.random.PRNGKey(0)
    kx, kw_key, kb = jax.random.split(key, 3)

    N, CIN, H, W = 2, 4, 16, 16
    COUT, KH, KW = 8, 3, 3

    x = jax.random.normal(kx, (N, CIN, H, W), dtype=jnp.float32)
    weight = jax.random.normal(kw_key, (COUT, CIN, KH, KW), dtype=jnp.float32) * 0.1
    bias = jax.random.normal(kb, (COUT,), dtype=jnp.float32) * 0.05

    # tm=128 so this toy shape (M = 2*16*16 = 512) actually exercises the grid
    # (4 steps); production sizes should use the default tm=512 (or 1024).
    out = parameter_module_wrapper_post_forward(x, weight, bias, tm=128)
    out = jax.block_until_ready(out)
    assert out.shape == (N, COUT, H, W)

    # Structural check: same math with bf16 matmul operands (tight tolerance).
    ref_bf16 = jax.block_until_ready(
        _reference_forward(x, weight, bias, matmul_dtype=jnp.bfloat16))
    assert jnp.allclose(out, ref_bf16, rtol=1e-2, atol=1e-2), "mismatch vs bf16-operand reference"

    # Semantic check vs full-f32 module reference (tolerance covers bf16 operands).
    ref_f32 = jax.block_until_ready(_reference_forward(x, weight, bias))
    assert jnp.allclose(out, ref_f32, rtol=2.5e-2, atol=2.5e-2), "mismatch vs f32 reference"

    print("KERNEL_OK")
</pallas_src>

<mosaic_0001>
module attributes {stable_mosaic.version = 11 : i64} {
  func.func @_quantize_weight_kernel(%arg0: memref<8x36xf32, #tpu.memory_space<vmem>>, %arg1: memref<8x36xf32, #tpu.memory_space<vmem>>) attributes {dimension_semantics = [], scalar_prefetch = 0 : i64, scratch_operands = 0 : i64, tpu.core_type = #tpu.core_type<tc>} {
    %c0 = arith.constant 0 : index
    %c0_0 = arith.constant 0 : index
    %0 = vector.load %arg0[%c0, %c0_0] : memref<8x36xf32, #tpu.memory_space<vmem>>, vector<8x36xf32>
    %1 = math.absf %0 : vector<8x36xf32>
    %2 = vector.shape_cast %1 : vector<8x36xf32> to vector<1x8x36xf32>
    %cst = arith.constant dense<0xFF800000> : vector<1xf32>
    %3 = vector.multi_reduction <maximumf>, %2, %cst [1, 2] : vector<1x8x36xf32> to vector<1xf32>
    %4 = vector.shape_cast %3 : vector<1xf32> to vector<1x1x1xf32>
    %5 = vector.extract %4[0, 0, 0] : f32 from vector<1x1x1xf32>
    %cst_1 = arith.constant 2.000000e+00 : f32
    %6 = arith.mulf %cst_1, %5 : f32
    %cst_2 = arith.constant 1.500000e+01 : f32
    %7 = arith.divf %6, %cst_2 : f32
    %cst_3 = arith.constant 9.99999993E-9 : f32
    %8 = arith.maximumf %7, %cst_3 : f32
    %9 = vector.broadcast %5 : f32 to vector<8x36xf32>
    %10 = arith.addf %0, %9 : vector<8x36xf32>
    %11 = vector.broadcast %8 : f32 to vector<8x36xf32>
    %12 = arith.divf %10, %11 : vector<8x36xf32>
    %13 = math.roundeven %12 : vector<8x36xf32>
    %cst_4 = arith.constant 0.000000e+00 : f32
    %cst_5 = arith.constant 1.500000e+01 : f32
    %14 = vector.broadcast %cst_4 : f32 to vector<8x36xf32>
    %15 = arith.maximumf %14, %13 : vector<8x36xf32>
    %16 = vector.broadcast %cst_5 : f32 to vector<8x36xf32>
    %17 = arith.minimumf %16, %15 : vector<8x36xf32>
    %18 = vector.broadcast %8 : f32 to vector<8x36xf32>
    %19 = arith.mulf %17, %18 : vector<8x36xf32>
    %20 = vector.broadcast %5 : f32 to vector<8x36xf32>
    %21 = arith.subf %19, %20 : vector<8x36xf32>
    %cst_6 = arith.constant dense<0.000000e+00> : vector<8xf32>
    %22 = vector.multi_reduction <add>, %21, %cst_6 [1] : vector<8x36xf32> to vector<8xf32>
    %23 = vector.shape_cast %22 : vector<8xf32> to vector<8x1xf32>
    %cst_7 = arith.constant 3.600000e+01 : f32
    %24 = vector.broadcast %cst_7 : f32 to vector<8x1xf32>
    %25 = arith.divf %23, %24 : vector<8x1xf32>
    %cst_8 = arith.constant dense<0.000000e+00> : vector<8xf32>
    %26 = vector.multi_reduction <add>, %0, %cst_8 [1] : vector<8x36xf32> to vector<8xf32>
    %27 = vector.shape_cast %26 : vector<8xf32> to vector<8x1xf32>
    %cst_9 = arith.constant 3.600000e+01 : f32
    %28 = vector.broadcast %cst_9 : f32 to vector<8x1xf32>
    %29 = arith.divf %27, %28 : vector<8x1xf32>
    %30 = arith.subf %25, %29 : vector<8x1xf32>
    %31 = vector.broadcast %30 : vector<8x1xf32> to vector<8x36xf32>
    %32 = arith.subf %21, %31 : vector<8x36xf32>
    %c0_10 = arith.constant 0 : index
    %c0_11 = arith.constant 0 : index
    %33 = vector.load %arg1[%c0_10, %c0_11] : memref<8x36xf32, #tpu.memory_space<vmem>>, vector<8x36xf32>
    tpu.vector_store %arg1[%c0_10, %c0_11], %32 {strides = array<i32>} : memref<8x36xf32, #tpu.memory_space<vmem>>, vector<8x36xf32>,
    return
  }
}

</mosaic_0001>

<llo_original>
// kernel: tpu_custom_call.1
$region0: #{tpu_custom_call.1}
  #allocation0 [shape = 'u32[]', space=smem, size = 0x4, offset = 0x4, fixed_abs, tag = 'smem constant byte address 0x4 - core index']
  #allocation1 [shape = 'u32[144,128]{1,0:T(1,128)}', space=vmem, size = 0x12000, scoped, tag = 'internal scratch']
  %s0 = inlined_call_operand.hbm [shape: f32[8,36], index: 0, kind: input, shape index: {}]
  %s1 = inlined_call_operand.hbm [shape: f32[8,36], index: 1, kind: output, shape index: {}]
  %s2 = sld [smem:[#allocation0]]
  $region18: #{tpu_custom_call.1} parent=0
    _
  %s4 = ssub.s32 1, %s2
  %s5 = scalar_select 0, %s4, %s2
  $region1: #{tpu_custom_call.1} parent=0
    #allocation2 [shape = 'u8[4096]{0}', space=vmem, size = 0x1000, scoped, tag = 'input window, operand 0, single buffered']
    #allocation3 [shape = 's32[1]{0}', space=sflag, size = 0x4, scoped, tag = 'scoped memory for tpu_custom_call.1']
    #allocation4 [shape = 's32[1]{0}', space=sflag, size = 0x4, scoped, tag = 'scoped memory for tpu_custom_call.1']
    #allocation5 [shape = 'u8[4096]{0}', space=vmem, size = 0x1000, scoped, tag = 'output window, operand 0, single buffered']
    %6 = vsyncpa [#allocation3], 0
    %7 = vsyncpa [#allocation4], 0
    // Predicated region
    $region2: #{tpu_custom_call.1} parent=1 // pred_check
      _
    $region3: #{tpu_custom_call.1} parent=1 // pred_check_branch
      %9 = sbr.rel (0) target = $region5
    $region4: #{tpu_custom_call.1} parent=1 // pred_region
      %s11 = ssub.s32 128, 128
      %12 = vsyncadd [#allocation3], %s11
      %s14 = sshll.u32 [#allocation2], 4
      %s15 = int_to_ptr.vmem [resolvable:$true] %s14
      %17 = dma.hbm_to_vmem [thread:$0]  %s0, 128, %s15, [#allocation3]
    $region5: #{tpu_custom_call.1} parent=1 // pred_fallthru
      _
    // Predicated region
    $region6: #{tpu_custom_call.1} parent=1 // pred_check
      _
    $region7: #{tpu_custom_call.1} parent=1 // pred_check_branch
      %19 = sbr.rel (0) target = $region9
    $region8: #{tpu_custom_call.1} parent=1 // pred_region
      %20 = dma.done [#allocation3], 128
    $region9: #{tpu_custom_call.1} parent=1 // pred_fallthru
      _
    %v21 = vld [vmem:[#allocation2] sm:$0xff]
    %v22 = vand.u32 2147483647, %v21
    %vm23 = vcmask 293888
    %v24 = vsel %vm23, %v22, -inf
    %25 = vmax.xlane.f32.xlu0 %v24
    %v26 = vpop.xlane.xlu0 %25
    %v27 = vrot.slane %v26, 4
    %v28 = vmax.f32 %v26, %v27
    %v29 = vrot.slane %v28, 2
    %v30 = vmax.f32 %v28, %v29
    %v31 = vrot.slane %v30, 1
    %v32 = vmax.f32 %v30, %v31
    %s33 = vtos %v32
    %s34 = smul.f32 %s33, 2.0
    %v35 = vrcp.pop 15.0
    %s36 = vtos %v35
    %s37 = smul.f32 %s34, %s36
    %s38 = smax.f32 %s37, 1e-08
    %v39 = vstv %s33
    %v40 = vadd.f32 %v21, %v39
    %v41 = vstv %s38
    %v42 = vrcp.pop %v41
    %v43 = vmul.f32 %v40, %v42
    %v44 = vround.ne.pseudo %v43
    %v45 = vmax.f32 %v44, 0.0
    %v46 = vmin.f32 %v45, 15.0
    %v47 = vmul.f32 %v46, %v41
    %v48 = vsub.f32 %v47, %v39
    %v49 = vsel %vm23, %v48, 0.0
    %50 = vadd.xlane.f32.xlu0 %v49
    %v51 = vpop.xlane.xlu0 %50
    %v52 = vrcp.pop 36.0
    %v53 = vmul.f32 %v51, %v52
    %v54 = vsel %vm23, %v21, 0.0
    %55 = vadd.xlane.f32.xlu0 %v54
    %v56 = vpop.xlane.xlu0 %55
    %v57 = vmul.f32 %v56, %v52
    %v58 = vsub.f32 %v53, %v57
    %v59 = vsub.f32 %v48, %v58
    %60 = vst.msk [vmem:[#allocation5] sm:$0xff] %vm23, %v59
    // Predicated region
    $region10: #{tpu_custom_call.1} parent=1 // pred_check
      _
    $region11: #{tpu_custom_call.1} parent=1 // pred_check_branch
      %62 = sbr.rel (0) target = $region13
    $region12: #{tpu_custom_call.1} parent=1 // pred_region
      %s64 = ssub.s32 128, 128
      %65 = vsyncadd [#allocation4], %s64
      %s67 = sshll.u32 [#allocation5], 4
      %s68 = int_to_ptr.vmem [resolvable:$true] %s67
      %70 = dma.vmem_to_hbm [thread:$0]  %s68, 128, %s1, [#allocation4]
    $region13: #{tpu_custom_call.1} parent=1 // pred_fallthru
      _
    // Predicated region
    $region14: #{tpu_custom_call.1} parent=1 // pred_check
      _
    $region15: #{tpu_custom_call.1} parent=1 // pred_check_branch
      %72 = sbr.rel (0) target = $region17
    $region16: #{tpu_custom_call.1} parent=1 // pred_region
      %73 = dma.done [#allocation4], 128
    $region17: #{tpu_custom_call.1} parent=1 // pred_fallthru
      _
    %74 = vsyncpa [#allocation3], 1
    %75 = vsyncpa [#allocation4], 1

</llo_original>
